<compile_context>
chip_gen: v5e
topology: v5e:2x2
jax: 0.10.0
libtpu: 0.0.40
codegen_flags: <defaults>
</compile_context>

<pallas_src>
import jax
import jax.numpy as jnp
from jax.experimental import pallas as pl
from jax.experimental.pallas import tpu as pltpu

_MXU_DTYPE = jnp.bfloat16  # MXU-native operand dtype (accumulate in f32)


def _make_kernel(tile_rows, L, C, H, K):
    assert K % 2 == 1, "padding='same' mapping implemented for odd K only"
    pad = (K - 1) // 2

    def kernel(z_ref, y_ref, wc_ref, bc_ref, wl_ref, bl_ref, out_ref):
        # x = y + z for this row tile (f32 elementwise path).
        y = y_ref[...].astype(jnp.float32)                   # (tile_rows, C)
        x = y + z_ref[...].astype(jnp.float32)               # (tile_rows, C)

        # Per-row position inside its own sequence.  Tile boundaries coincide
        # with sequence boundaries, so a single (tile_rows, 1) column suffices
        # for every tap's edge mask (no (rows, C) index array).
        l_idx = jax.lax.broadcasted_iota(jnp.int32, (tile_rows, 1), 0) % L

        # Conv1d(C->H, K, padding='same') as K accumulating MXU dots.
        # Tap k needs x[l + (k - pad)], zero outside [0, L).  The roll stays
        # inside the tile; rows whose shifted index leaves the sequence are
        # masked to zero, which also prevents any cross-sequence mixing.
        h = jnp.zeros((tile_rows, H), jnp.float32)
        for k in range(K):
            s = k - pad
            if s == 0:
                tap = x
            else:
                rolled = pltpu.roll(x, (-s) % tile_rows, axis=0)
                valid = (l_idx >= -s) if s < 0 else (l_idx < L - s)
                tap = jnp.where(valid, rolled, 0.0)
            h = h + jnp.dot(tap.astype(_MXU_DTYPE), wc_ref[k],
                            preferred_element_type=jnp.float32)

        h = jnp.maximum(h + bc_ref[...], 0.0)                 # bias + ReLU, f32
        # TODO(synk): nn.Dropout(p=0.0) is identity in forward; no-op here.

        # Linear(H -> C) + residual (residual added in f32).
        lin = jnp.dot(h.astype(_MXU_DTYPE), wl_ref[...],
                      preferred_element_type=jnp.float32) + bl_ref[...]
        out_ref[...] = (y + lin).astype(out_ref.dtype)

    return kernel


def prepare_params(w_conv, b_conv, w_lin, b_lin):
    """One-time weight prep (hoisted out of the hot path).

    w_conv: (H, C, K) torch Conv1d layout -> (K, C, H) bf16 per-tap matrices.
    w_lin:  (C, H) torch Linear layout    -> (H, C) bf16.
    Biases stay f32.
    """
    H, C, K = w_conv.shape
    wc = jnp.transpose(w_conv, (2, 1, 0)).astype(_MXU_DTYPE)      # (K, C, H)
    bc = b_conv.reshape(1, H).astype(jnp.float32)
    wl = jnp.transpose(w_lin, (1, 0)).astype(_MXU_DTYPE)          # (H, C)
    bl = b_lin.reshape(1, C).astype(jnp.float32)
    return wc, bc, wl, bl


def basic_cnn1d_block(z, y, wc, bc, wl, bl, *, batches_per_tile=None):
    """z, y: (B, L, C).  wc/bc/wl/bl from prepare_params()."""
    B, L, C = z.shape
    K, _, H = wc.shape
    BL = B * L

    # Row-tile sizing: whole sequences per tile (sequence boundaries align
    # with tile boundaries), targeting ~512 rows per tile.
    if batches_per_tile is None:
        batches_per_tile = max(1, min(B, 512 // max(L, 1)))
        while B % batches_per_tile:
            batches_per_tile -= 1
    assert B % batches_per_tile == 0, "batches_per_tile must divide B"
    tile_rows = batches_per_tile * L
    if tile_rows % 8 != 0 and tile_rows != BL:
        # Sublane alignment fallback: single resident block (full array dims
        # are always a legal block shape).
        batches_per_tile, tile_rows = B, BL
    num_tiles = BL // tile_rows

    z_flat = z.reshape(BL, C)
    y_flat = y.reshape(BL, C)

    kernel = _make_kernel(tile_rows, L, C, H, K)

    out_flat = pl.pallas_call(
        kernel,
        out_shape=jax.ShapeDtypeStruct((BL, C), z.dtype),
        grid=(num_tiles,),
        in_specs=[
            pl.BlockSpec((tile_rows, C), lambda i: (i, 0)),     # z rows
            pl.BlockSpec((tile_rows, C), lambda i: (i, 0)),     # y rows
            pl.BlockSpec((K, C, H), lambda i: (0, 0, 0)),       # conv W (grid-invariant)
            pl.BlockSpec((1, H), lambda i: (0, 0)),             # conv b
            pl.BlockSpec((H, C), lambda i: (0, 0)),             # linear W
            pl.BlockSpec((1, C), lambda i: (0, 0)),             # linear b
        ],
        out_specs=pl.BlockSpec((tile_rows, C), lambda i: (i, 0)),
        compiler_params=pltpu.CompilerParams(
            # Independent row tiles -> shard across v7x's two TensorCores.
            dimension_semantics=("parallel",),
            # Tiles are sized well under the v7x 64 MiB physical budget;
            # 32 MiB scoped leaves headroom on every generation.
            vmem_limit_bytes=32 * 1024 * 1024,
        ),
    )(z_flat, y_flat, wc, bc, wl, bl)

    return out_flat.reshape(B, L, C)


def _reference(z, y, w_conv, b_conv, w_lin, b_lin):
    """Plain-JAX f32 reference mirroring the PyTorch forward."""
    x = y + z                                              # (B, L, C)
    x = jnp.transpose(x, (0, 2, 1))                        # (B, C, L)
    H, C, K = w_conv.shape
    pad = (K - 1) // 2
    xp = jnp.pad(x, ((0, 0), (0, 0), (pad, K - 1 - pad)))
    conv = jnp.zeros((x.shape[0], H, x.shape[2]), jnp.float32)
    for k in range(K):
        conv = conv + jnp.einsum('bcl,hc->bhl', xp[:, :, k:k + x.shape[2]],
                                 w_conv[:, :, k])
    conv = conv + b_conv[None, :, None]
    conv = jnp.maximum(conv, 0.0)
    conv = jnp.transpose(conv, (0, 2, 1))                  # (B, L, H)
    lin = conv @ w_lin.T + b_lin
    return y + lin


if __name__ == "__main__":
    # Shapes implied by the module: z, y are (batch, seq, input_size).
    B, L, C, H, K = 2, 8, 4, 32, 3

    key = jax.random.PRNGKey(0)
    kz, ky, kwc, kbc, kwl, kbl = jax.random.split(key, 6)

    z = jax.random.normal(kz, (B, L, C), dtype=jnp.float32)
    y = jax.random.normal(ky, (B, L, C), dtype=jnp.float32)

    # Deterministic parameter init (shapes match nn.Conv1d / nn.Linear).
    w_conv = jax.random.normal(kwc, (H, C, K), dtype=jnp.float32) * 0.1
    b_conv = jax.random.normal(kbc, (H,), dtype=jnp.float32) * 0.1
    w_lin = jax.random.normal(kwl, (C, H), dtype=jnp.float32) * 0.1
    b_lin = jax.random.normal(kbl, (C,), dtype=jnp.float32) * 0.1

    # Weight prep done once, outside the hot path; forward is jitted and
    # closes over the prepared (already transposed / bf16) parameters.
    wc, bc, wl, bl = prepare_params(w_conv, b_conv, w_lin, b_lin)
    fwd = jax.jit(lambda zz, yy: basic_cnn1d_block(
        zz, yy, wc, bc, wl, bl, batches_per_tile=1))   # 2-step grid in the test

    out = jax.block_until_ready(fwd(z, y))

    ref = _reference(z, y, w_conv, b_conv, w_lin, b_lin)
    assert out.shape == (B, L, C)
    # bf16 MXU operands (f32 accumulation) -> loosened tolerance vs f32 ref.
    assert jnp.allclose(out, ref, atol=3e-2, rtol=3e-2), "mismatch vs reference"

    print("KERNEL_OK")
</pallas_src>

<mosaic_0001>
module attributes {stable_mosaic.version = 11 : i64} {
  func.func @kernel(%arg0: i32, %arg1: memref<8x4xf32, #tpu.memory_space<vmem>>, %arg2: memref<8x4xf32, #tpu.memory_space<vmem>>, %arg3: memref<3x4x32xbf16, #tpu.memory_space<vmem>>, %arg4: memref<1x32xf32, #tpu.memory_space<vmem>>, %arg5: memref<32x4xbf16, #tpu.memory_space<vmem>>, %arg6: memref<1x4xf32, #tpu.memory_space<vmem>>, %arg7: memref<8x4xf32, #tpu.memory_space<vmem>>) attributes {dimension_semantics = [#tpu.dimension_semantics<parallel>], iteration_bounds = array<i64: 2>, scalar_prefetch = 0 : i64, scratch_operands = 0 : i64, tpu.core_type = #tpu.core_type<tc>, window_params = [{transform_indices = @transform_0, window_bounds = array<i64: 8, 4>}, {transform_indices = @transform_1, window_bounds = array<i64: 8, 4>}, {pipeline_mode = #tpu.pipeline_mode<synchronous>, transform_indices = @transform_2, window_bounds = array<i64: 3, 4, 32>}, {pipeline_mode = #tpu.pipeline_mode<synchronous>, transform_indices = @transform_3, window_bounds = array<i64: 1, 32>}, {pipeline_mode = #tpu.pipeline_mode<synchronous>, transform_indices = @transform_4, window_bounds = array<i64: 32, 4>}, {pipeline_mode = #tpu.pipeline_mode<synchronous>, transform_indices = @transform_5, window_bounds = array<i64: 1, 4>}, {transform_indices = @transform_6, window_bounds = array<i64: 8, 4>}]} {
    %c0 = arith.constant 0 : index
    %c0_0 = arith.constant 0 : index
    %0 = vector.load %arg2[%c0, %c0_0] : memref<8x4xf32, #tpu.memory_space<vmem>>, vector<8x4xf32>
    %c0_1 = arith.constant 0 : index
    %c0_2 = arith.constant 0 : index
    %1 = vector.load %arg1[%c0_1, %c0_2] : memref<8x4xf32, #tpu.memory_space<vmem>>, vector<8x4xf32>
    %2 = arith.addf %0, %1 : vector<8x4xf32>
    %3 = tpu.iota {dimensions = array<i32: 0>} : vector<8x1xi32>
    %c8_i32 = arith.constant 8 : i32
    %c0_i32 = arith.constant 0 : i32
    %4 = arith.cmpi eq, %c8_i32, %c0_i32 : i32
    %c1_i32 = arith.constant 1 : i32
    %5 = arith.select %4, %c1_i32, %c8_i32 : i32
    %6 = vector.broadcast %5 : i32 to vector<8x1xi32>
    %7 = arith.remsi %3, %6 : vector<8x1xi32>
    %c0_i32_3 = arith.constant 0 : i32
    %8 = vector.broadcast %c0_i32_3 : i32 to vector<8x1xi32>
    %9 = arith.cmpi ne, %7, %8 : vector<8x1xi32>
    %c0_i32_4 = arith.constant 0 : i32
    %10 = vector.broadcast %c0_i32_4 : i32 to vector<8x1xi32>
    %11 = arith.cmpi slt, %7, %10 : vector<8x1xi32>
    %c0_i32_5 = arith.constant 0 : i32
    %12 = arith.cmpi slt, %5, %c0_i32_5 : i32
    %13 = vector.broadcast %12 : i1 to vector<8x1xi1>
    %14 = vector.broadcast %13 : vector<8x1xi1> to vector<8x1xi1>
    %15 = arith.xori %11, %14 : vector<8x1xi1>
    %16 = arith.andi %15, %9 : vector<8x1xi1>
    %17 = vector.broadcast %5 : i32 to vector<8x1xi32>
    %18 = arith.addi %7, %17 : vector<8x1xi32>
    %19 = arith.select %16, %18, %7 : vector<8x1xi1>, vector<8x1xi32>
    %cst = arith.constant 0.000000e+00 : f32
    %20 = vector.broadcast %cst : f32 to vector<8x32xf32>
    %c1_i32_6 = arith.constant 1 : i32
    %21 = tpu.dynamic_rotate %2 by %c1_i32_6 dim 0 : vector<8x4xf32>, i32 -> vector<8x4xf32>
    %c1_i32_7 = arith.constant 1 : i32
    %22 = vector.broadcast %c1_i32_7 : i32 to vector<8x1xi32>
    %23 = arith.cmpi sge, %19, %22 : vector<8x1xi32>
    %cst_8 = arith.constant 0.000000e+00 : f32
    %24 = vector.shape_cast %23 : vector<8x1xi1> to vector<8x1xi1>
    %25 = vector.broadcast %24 : vector<8x1xi1> to vector<8x4xi1>
    %26 = vector.broadcast %cst_8 : f32 to vector<8x4xf32>
    %27 = arith.select %25, %21, %26 : vector<8x4xi1>, vector<8x4xf32>
    %28 = arith.truncf %27 : vector<8x4xf32> to vector<8x4xbf16>
    %c0_9 = arith.constant 0 : index
    %c0_10 = arith.constant 0 : index
    %c0_11 = arith.constant 0 : index
    %29 = vector.load %arg3[%c0_9, %c0_10, %c0_11] : memref<3x4x32xbf16, #tpu.memory_space<vmem>>, vector<1x4x32xbf16>
    %30 = vector.shape_cast %29 : vector<1x4x32xbf16> to vector<4x32xbf16>
    %cst_12 = arith.constant dense<0.000000e+00> : vector<8x32xf32>
    %31 = tpu.matmul %28, %30, %cst_12 {dimension_numbers = #tpu.dot_dimension_numbers<[1], [0], [0], [1], [0, 0, 1, 1], [], []>} : vector<8x4xbf16>, vector<4x32xbf16>, vector<8x32xf32> -> vector<8x32xf32>
    %32 = arith.addf %20, %31 : vector<8x32xf32>
    %33 = arith.truncf %2 : vector<8x4xf32> to vector<8x4xbf16>
    %c1 = arith.constant 1 : index
    %c0_13 = arith.constant 0 : index
    %c0_14 = arith.constant 0 : index
    %34 = vector.load %arg3[%c1, %c0_13, %c0_14] : memref<3x4x32xbf16, #tpu.memory_space<vmem>>, vector<1x4x32xbf16>
    %35 = vector.shape_cast %34 : vector<1x4x32xbf16> to vector<4x32xbf16>
    %cst_15 = arith.constant dense<0.000000e+00> : vector<8x32xf32>
    %36 = tpu.matmul %33, %35, %cst_15 {dimension_numbers = #tpu.dot_dimension_numbers<[1], [0], [0], [1], [0, 0, 1, 1], [], []>} : vector<8x4xbf16>, vector<4x32xbf16>, vector<8x32xf32> -> vector<8x32xf32>
    %37 = arith.addf %32, %36 : vector<8x32xf32>
    %c7_i32 = arith.constant 7 : i32
    %38 = tpu.dynamic_rotate %2 by %c7_i32 dim 0 : vector<8x4xf32>, i32 -> vector<8x4xf32>
    %c7_i32_16 = arith.constant 7 : i32
    %39 = vector.broadcast %c7_i32_16 : i32 to vector<8x1xi32>
    %40 = arith.cmpi slt, %19, %39 : vector<8x1xi32>
    %cst_17 = arith.constant 0.000000e+00 : f32
    %41 = vector.shape_cast %40 : vector<8x1xi1> to vector<8x1xi1>
    %42 = vector.broadcast %41 : vector<8x1xi1> to vector<8x4xi1>
    %43 = vector.broadcast %cst_17 : f32 to vector<8x4xf32>
    %44 = arith.select %42, %38, %43 : vector<8x4xi1>, vector<8x4xf32>
    %45 = arith.truncf %44 : vector<8x4xf32> to vector<8x4xbf16>
    %c2 = arith.constant 2 : index
    %c0_18 = arith.constant 0 : index
    %c0_19 = arith.constant 0 : index
    %46 = vector.load %arg3[%c2, %c0_18, %c0_19] : memref<3x4x32xbf16, #tpu.memory_space<vmem>>, vector<1x4x32xbf16>
    %47 = vector.shape_cast %46 : vector<1x4x32xbf16> to vector<4x32xbf16>
    %cst_20 = arith.constant dense<0.000000e+00> : vector<8x32xf32>
    %48 = tpu.matmul %45, %47, %cst_20 {dimension_numbers = #tpu.dot_dimension_numbers<[1], [0], [0], [1], [0, 0, 1, 1], [], []>} : vector<8x4xbf16>, vector<4x32xbf16>, vector<8x32xf32> -> vector<8x32xf32>
    %49 = arith.addf %37, %48 : vector<8x32xf32>
    %c0_21 = arith.constant 0 : index
    %c0_22 = arith.constant 0 : index
    %50 = vector.load %arg4[%c0_21, %c0_22] : memref<1x32xf32, #tpu.memory_space<vmem>>, vector<1x32xf32>
    %51 = vector.broadcast %50 : vector<1x32xf32> to vector<8x32xf32>
    %52 = arith.addf %49, %51 : vector<8x32xf32>
    %cst_23 = arith.constant 0.000000e+00 : f32
    %53 = vector.broadcast %cst_23 : f32 to vector<8x32xf32>
    %54 = arith.maximumf %52, %53 : vector<8x32xf32>
    %55 = arith.truncf %54 : vector<8x32xf32> to vector<8x32xbf16>
    %c0_24 = arith.constant 0 : index
    %c0_25 = arith.constant 0 : index
    %56 = vector.load %arg5[%c0_24, %c0_25] : memref<32x4xbf16, #tpu.memory_space<vmem>>, vector<32x4xbf16>
    %cst_26 = arith.constant dense<0.000000e+00> : vector<8x4xf32>
    %57 = tpu.matmul %55, %56, %cst_26 {dimension_numbers = #tpu.dot_dimension_numbers<[1], [0], [0], [1], [0, 0, 1, 1], [], []>} : vector<8x32xbf16>, vector<32x4xbf16>, vector<8x4xf32> -> vector<8x4xf32>
    %c0_27 = arith.constant 0 : index
    %c0_28 = arith.constant 0 : index
    %58 = vector.load %arg6[%c0_27, %c0_28] : memref<1x4xf32, #tpu.memory_space<vmem>>, vector<1x4xf32>
    %59 = vector.broadcast %58 : vector<1x4xf32> to vector<8x4xf32>
    %60 = arith.addf %57, %59 : vector<8x4xf32>
    %61 = arith.addf %0, %60 : vector<8x4xf32>
    %c0_29 = arith.constant 0 : index
    %c0_30 = arith.constant 0 : index
    %62 = vector.load %arg7[%c0_29, %c0_30] : memref<8x4xf32, #tpu.memory_space<vmem>>, vector<8x4xf32>
    tpu.vector_store %arg7[%c0_29, %c0_30], %61 {strides = array<i32>} : memref<8x4xf32, #tpu.memory_space<vmem>>, vector<8x4xf32>,
    return
  }
  func.func @transform_0(%arg0: i32) -> (i32, i32) {
    %c0_i32 = arith.constant 0 : i32
    %c0_i32_0 = arith.constant 0 : i32
    return %arg0, %c0_i32 : i32, i32
  }
  func.func @transform_1(%arg0: i32) -> (i32, i32) {
    %c0_i32 = arith.constant 0 : i32
    %c0_i32_0 = arith.constant 0 : i32
    return %arg0, %c0_i32 : i32, i32
  }
  func.func @transform_2(%arg0: i32) -> (i32, i32, i32) {
    %c0_i32 = arith.constant 0 : i32
    %c0_i32_0 = arith.constant 0 : i32
    %c0_i32_1 = arith.constant 0 : i32
    %c0_i32_2 = arith.constant 0 : i32
    return %c0_i32, %c0_i32_0, %c0_i32_1 : i32, i32, i32
  }
  func.func @transform_3(%arg0: i32) -> (i32, i32) {
    %c0_i32 = arith.constant 0 : i32
    %c0_i32_0 = arith.constant 0 : i32
    %c0_i32_1 = arith.constant 0 : i32
    return %c0_i32, %c0_i32_0 : i32, i32
  }
  func.func @transform_4(%arg0: i32) -> (i32, i32) {
    %c0_i32 = arith.constant 0 : i32
    %c0_i32_0 = arith.constant 0 : i32
    %c0_i32_1 = arith.constant 0 : i32
    return %c0_i32, %c0_i32_0 : i32, i32
  }
  func.func @transform_5(%arg0: i32) -> (i32, i32) {
    %c0_i32 = arith.constant 0 : i32
    %c0_i32_0 = arith.constant 0 : i32
    %c0_i32_1 = arith.constant 0 : i32
    return %c0_i32, %c0_i32_0 : i32, i32
  }
  func.func @transform_6(%arg0: i32) -> (i32, i32) {
    %c0_i32 = arith.constant 0 : i32
    %c0_i32_0 = arith.constant 0 : i32
    return %arg0, %c0_i32 : i32, i32
  }
}

</mosaic_0001>

<llo_original>
// kernel: _lambda_.1
$region0: #{_lambda_.1}
  #allocation0 [shape = 'u32[]', space=smem, size = 0x4, offset = 0x4, fixed_abs, tag = 'smem constant byte address 0x4 - core index']
  #allocation1 [shape = 'u32[72,128]{1,0:T(1,128)}', space=vmem, size = 0x9000, scoped, tag = 'internal scratch']
  %s0 = inlined_call_operand.vmem [shape: f32[16,4], index: 0, kind: input, shape index: {}]
  %s1 = inlined_call_operand.vmem [shape: f32[16,4], index: 1, kind: input, shape index: {}]
  %s2 = inlined_call_operand.vmem [shape: bf16[3,4,32], index: 2, kind: input, shape index: {}]
  %s3 = inlined_call_operand.vmem [shape: f32[1,32], index: 3, kind: input, shape index: {}]
  %s4 = inlined_call_operand.vmem [shape: bf16[32,4], index: 4, kind: input, shape index: {}]
  %s5 = inlined_call_operand.vmem [shape: f32[1,4], index: 5, kind: input, shape index: {}]
  %s6 = inlined_call_operand.vmem [shape: f32[16,4], index: 6, kind: output, shape index: {}]
  %s7 = sld [smem:[#allocation0]]
  $region57: #{_lambda_.1} parent=0
    _
  %s9 = ssub.s32 1, %s7
  %s10 = scalar_select 0, %s9, %s7
  loop: start=0, step=1, limit=4
  $region2: #{_lambda_.1} parent=0 // loop_pre_header
    _
  $region3: #{_lambda_.1} parent=0 // loop_header
    %s12 = sphi 0, %s16
    %p13 = scmp.ge.s32.totalorder %s12, 4
    %s22 = sphi 0, %s24
    %s25 = sphi 0, %s22
    %s26 = sphi 0, %s25
    %s42 = sphi 0, %s26
    %s48 = sphi 0, %s50
    %s51 = sphi 0, %s48
    %s52 = sphi 0, %s51
    %s68 = sphi 0, %s52
    %s72 = sphi 0, %s72
    %s74 = sphi 0, %s72
    %s75 = sphi 0, %s74
    %s89 = sphi 0, %s75
    %s93 = sphi 0, %s93
    %s95 = sphi 0, %s93
    %s96 = sphi 0, %s95
    %s110 = sphi 0, %s96
    %s114 = sphi 0, %s114
    %s116 = sphi 0, %s114
    %s117 = sphi 0, %s116
    %s131 = sphi 0, %s117
    %s135 = sphi 0, %s135
    %s137 = sphi 0, %s135
    %s138 = sphi 0, %s137
    %s152 = sphi 0, %s138
    %s158 = sphi 0, %s160
    %s161 = sphi 0, %s158
    %s162 = sphi 0, %s161
    %s178 = sphi 0, %s162
  $region4: #{_lambda_.1} parent=0 // loop_header_branch
    %15 = sbr.rel (%p13) target = $region8
  $region5: #{_lambda_.1} parent=0 // loop_body
    %s17 = ssub.s32 %s12, 1
    %s18 = ssub.s32 %s12, 2
    %s19 = sadd.s32 %s12, 1
    %s20 = ssub.s32 %s12, %s19
    %p21 = scmp.eq.s32.totalorder %s20, 0
    %s23 = sadd.s32 %s22, 1
    %s24 = scalar_select %p21, %s22, %s23
    %p27 = pneg %p21
    %p28 = scmp.eq.s32.totalorder %s12, 1
    %p29 = por %p27, %p28
    %p30 = scmp.ne.s32.totalorder %s22, %s25
    %p31 = scmp.eq.s32.totalorder %s12, 0
    %p32 = por %p30, %p31
    %p33 = scmp.ne.s32.totalorder %s22, %s25
    %p34 = scmp.eq.s32.totalorder %s17, 1
    %p35 = por %p33, %p34
    %p36 = scmp.ne.s32.totalorder %s25, %s26
    %p37 = scmp.eq.s32.totalorder %s17, 0
    %p38 = por %p36, %p37
    %p39 = scmp.ne.s32.totalorder %s25, %s26
    %p40 = scmp.eq.s32.totalorder %s18, 1
    %p41 = por %p39, %p40
    %p43 = scmp.ne.s32.totalorder %s26, %s42
    %p44 = scmp.eq.s32.totalorder %s18, 0
    %p45 = por %p43, %p44
    %s46 = ssub.s32 %s12, %s19
    %p47 = scmp.eq.s32.totalorder %s46, 0
    %s49 = sadd.s32 %s48, 1
    %s50 = scalar_select %p47, %s48, %s49
    %p53 = pneg %p47
    %p54 = scmp.eq.s32.totalorder %s12, 1
    %p55 = por %p53, %p54
    %p56 = scmp.ne.s32.totalorder %s48, %s51
    %p57 = scmp.eq.s32.totalorder %s12, 0
    %p58 = por %p56, %p57
    %p59 = scmp.ne.s32.totalorder %s48, %s51
    %p60 = scmp.eq.s32.totalorder %s17, 1
    %p61 = por %p59, %p60
    %p62 = scmp.ne.s32.totalorder %s51, %s52
    %p63 = scmp.eq.s32.totalorder %s17, 0
    %p64 = por %p62, %p63
    %p65 = scmp.ne.s32.totalorder %s51, %s52
    %p66 = scmp.eq.s32.totalorder %s18, 1
    %p67 = por %p65, %p66
    %p69 = scmp.ne.s32.totalorder %s52, %s68
    %p70 = scmp.eq.s32.totalorder %s18, 0
    %p71 = por %p69, %p70
    %s73 = sadd.s32 %s72, 1
    %p76 = scmp.eq.s32.totalorder %s12, 1
    %p77 = scmp.ne.s32.totalorder %s72, %s74
    %p78 = scmp.eq.s32.totalorder %s12, 0
    %p79 = por %p77, %p78
    %p80 = scmp.ne.s32.totalorder %s72, %s74
    %p81 = scmp.eq.s32.totalorder %s17, 1
    %p82 = por %p80, %p81
    %p83 = scmp.ne.s32.totalorder %s74, %s75
    %p84 = scmp.eq.s32.totalorder %s17, 0
    %p85 = por %p83, %p84
    %p86 = scmp.ne.s32.totalorder %s74, %s75
    %p87 = scmp.eq.s32.totalorder %s18, 1
    %p88 = por %p86, %p87
    %p90 = scmp.ne.s32.totalorder %s75, %s89
    %p91 = scmp.eq.s32.totalorder %s18, 0
    %p92 = por %p90, %p91
    %s94 = sadd.s32 %s93, 1
    %p97 = scmp.eq.s32.totalorder %s12, 1
    %p98 = scmp.ne.s32.totalorder %s93, %s95
    %p99 = scmp.eq.s32.totalorder %s12, 0
    %p100 = por %p98, %p99
    %p101 = scmp.ne.s32.totalorder %s93, %s95
    %p102 = scmp.eq.s32.totalorder %s17, 1
    %p103 = por %p101, %p102
    %p104 = scmp.ne.s32.totalorder %s95, %s96
    %p105 = scmp.eq.s32.totalorder %s17, 0
    %p106 = por %p104, %p105
    %p107 = scmp.ne.s32.totalorder %s95, %s96
    %p108 = scmp.eq.s32.totalorder %s18, 1
    %p109 = por %p107, %p108
    %p111 = scmp.ne.s32.totalorder %s96, %s110
    %p112 = scmp.eq.s32.totalorder %s18, 0
    %p113 = por %p111, %p112
    %s115 = sadd.s32 %s114, 1
    %p118 = scmp.eq.s32.totalorder %s12, 1
    %p119 = scmp.ne.s32.totalorder %s114, %s116
    %p120 = scmp.eq.s32.totalorder %s12, 0
    %p121 = por %p119, %p120
    %p122 = scmp.ne.s32.totalorder %s114, %s116
    %p123 = scmp.eq.s32.totalorder %s17, 1
    %p124 = por %p122, %p123
    %p125 = scmp.ne.s32.totalorder %s116, %s117
    %p126 = scmp.eq.s32.totalorder %s17, 0
    %p127 = por %p125, %p126
    %p128 = scmp.ne.s32.totalorder %s116, %s117
    %p129 = scmp.eq.s32.totalorder %s18, 1
    %p130 = por %p128, %p129
    %p132 = scmp.ne.s32.totalorder %s117, %s131
    %p133 = scmp.eq.s32.totalorder %s18, 0
    %p134 = por %p132, %p133
    %s136 = sadd.s32 %s135, 1
    %p139 = scmp.eq.s32.totalorder %s12, 1
    %p140 = scmp.ne.s32.totalorder %s135, %s137
    %p141 = scmp.eq.s32.totalorder %s12, 0
    %p142 = por %p140, %p141
    %p143 = scmp.ne.s32.totalorder %s135, %s137
    %p144 = scmp.eq.s32.totalorder %s17, 1
    %p145 = por %p143, %p144
    %p146 = scmp.ne.s32.totalorder %s137, %s138
    %p147 = scmp.eq.s32.totalorder %s17, 0
    %p148 = por %p146, %p147
    %p149 = scmp.ne.s32.totalorder %s137, %s138
    %p150 = scmp.eq.s32.totalorder %s18, 1
    %p151 = por %p149, %p150
    %p153 = scmp.ne.s32.totalorder %s138, %s152
    %p154 = scmp.eq.s32.totalorder %s18, 0
    %p155 = por %p153, %p154
    %s156 = ssub.s32 %s12, %s19
    %p157 = scmp.eq.s32.totalorder %s156, 0
    %s159 = sadd.s32 %s158, 1
    %s160 = scalar_select %p157, %s158, %s159
    %p163 = pneg %p157
    %p164 = scmp.eq.s32.totalorder %s12, 1
    %p165 = por %p163, %p164
    %p166 = scmp.ne.s32.totalorder %s158, %s161
    %p167 = scmp.eq.s32.totalorder %s12, 0
    %p168 = por %p166, %p167
    %p169 = scmp.ne.s32.totalorder %s158, %s161
    %p170 = scmp.eq.s32.totalorder %s17, 1
    %p171 = por %p169, %p170
    %p172 = scmp.ne.s32.totalorder %s161, %s162
    %p173 = scmp.eq.s32.totalorder %s17, 0
    %p174 = por %p172, %p173
    %p175 = scmp.ne.s32.totalorder %s161, %s162
    %p176 = scmp.eq.s32.totalorder %s18, 1
    %p177 = por %p175, %p176
    %p179 = scmp.ne.s32.totalorder %s162, %s178
    %p180 = scmp.eq.s32.totalorder %s18, 0
    %p181 = por %p179, %p180
    %p182 = scmp.le.s32.totalorder 1, %s12
    %p183 = scmp.lt.s32.totalorder %s12, 3
    %p184 = pnand %p182, %p183
    %p185 = pneg %p184
    // Predicated region
    $region9: #{_lambda_.1} parent=5 // pred_check
      _
    $region10: #{_lambda_.1} parent=5 // pred_check_branch
      %187 = sbr.rel (%p184) target = $region12
    $region11: #{_lambda_.1} parent=5 // pred_region
      %s188 = ssub.s32 %s12, 1
      // Predicated region
      $region13: #{_lambda_.1} parent=11 // pred_check
        %p189 = pneg %p85
      $region14: #{_lambda_.1} parent=11 // pred_check_branch
        %191 = sbr.rel (%p189) target = $region16
      $region15: #{_lambda_.1} parent=11 // pred_region
        _
      $region16: #{_lambda_.1} parent=11 // pred_fallthru
        _
      // Predicated region
      $region17: #{_lambda_.1} parent=11 // pred_check
        %p192 = pneg %p106
      $region18: #{_lambda_.1} parent=11 // pred_check_branch
        %194 = sbr.rel (%p192) target = $region20
      $region19: #{_lambda_.1} parent=11 // pred_region
        _
      $region20: #{_lambda_.1} parent=11 // pred_fallthru
        _
      // Predicated region
      $region21: #{_lambda_.1} parent=11 // pred_check
        %p195 = pneg %p127
      $region22: #{_lambda_.1} parent=11 // pred_check_branch
        %197 = sbr.rel (%p195) target = $region24
      $region23: #{_lambda_.1} parent=11 // pred_region
        _
      $region24: #{_lambda_.1} parent=11 // pred_fallthru
        _
      // Predicated region
      $region25: #{_lambda_.1} parent=11 // pred_check
        %p198 = pneg %p148
      $region26: #{_lambda_.1} parent=11 // pred_check_branch
        %200 = sbr.rel (%p198) target = $region28
      $region27: #{_lambda_.1} parent=11 // pred_region
        _
      $region28: #{_lambda_.1} parent=11 // pred_fallthru
        _
    $region12: #{_lambda_.1} parent=5 // pred_fallthru
      _
    %p201 = scmp.lt.s32.totalorder %s12, 2
    // Predicated region
    $region29: #{_lambda_.1} parent=5 // pred_check
      %p202 = pneg %p201
    $region30: #{_lambda_.1} parent=5 // pred_check_branch
      %204 = sbr.rel (%p202) target = $region32
    $region31: #{_lambda_.1} parent=5 // pred_region
      // Predicated region
      $region33: #{_lambda_.1} parent=31 // pred_check
        %p205 = pneg %p32
      $region34: #{_lambda_.1} parent=31 // pred_check_branch
        %207 = sbr.rel (%p205) target = $region36
      $region35: #{_lambda_.1} parent=31 // pred_region
        %p208 = scmp.lt.s32.totalorder %s12, 1
        %s209 = scalar_select %p208, %s12, 1
        %s210 = smul.addr %s209, 8
        %s211 = scalar_lea.vmem %s0, %s210
      $region36: #{_lambda_.1} parent=31 // pred_fallthru
        _
      // Predicated region
      $region37: #{_lambda_.1} parent=31 // pred_check
        %p212 = pneg %p58
      $region38: #{_lambda_.1} parent=31 // pred_check_branch
        %214 = sbr.rel (%p212) target = $region40
      $region39: #{_lambda_.1} parent=31 // pred_region
        %p215 = scmp.lt.s32.totalorder %s12, 1
        %s216 = scalar_select %p215, %s12, 1
        %s217 = smul.addr %s216, 8
        %s218 = scalar_lea.vmem %s1, %s217
      $region40: #{_lambda_.1} parent=31 // pred_fallthru
        _
    $region32: #{_lambda_.1} parent=5 // pred_fallthru
      _
    %p219 = scmp.le.s32.totalorder 1, %s12
    %p220 = scmp.lt.s32.totalorder %s12, 3
    %p221 = pnand %p219, %p220
    %p222 = pneg %p221
    // Predicated region
    $region41: #{_lambda_.1} parent=5 // pred_check
      _
    $region42: #{_lambda_.1} parent=5 // pred_check_branch
      %224 = sbr.rel (%p221) target = $region44
    $region43: #{_lambda_.1} parent=5 // pred_region
      %s225 = ssub.s32 %s12, 1
      %p226 = scmp.lt.s32.totalorder %s17, 1
      %s227 = scalar_select %p226, %s17, 1
      %s228 = smul.addr %s227, 8
      %s229 = scalar_lea.vmem %s0, %s228
      %p230 = pneg %p38
      %p231 = pneg %p35
      %p232 = scmp.lt.s32.totalorder %s17, 1
      %s233 = scalar_select %p232, %s17, 1
      %s234 = smul.addr %s233, 8
      %s235 = scalar_lea.vmem %s1, %s234
      %p236 = pneg %p64
      %p237 = pneg %p61
      %p238 = pneg %p85
      %p239 = pneg %p82
      %p240 = pneg %p106
      %p241 = pneg %p103
      %p242 = pneg %p127
      %p243 = pneg %p124
      %p244 = pneg %p148
      %p245 = pneg %p145
      %p246 = pneg %p174
      %p247 = pneg %p171
      %p248 = scmp.lt.s32.totalorder %s17, 1
      %s249 = scalar_select %p248, %s17, 1
      %s250 = smul.addr %s249, 8
      %s251 = scalar_lea.vmem %s6, %s250
      %p252 = scmp.lt.s32.totalorder %s17, 1
      %s253 = scalar_select %p252, %s17, 1
      %s254 = smul.addr %s253, 8
      %s255 = scalar_lea.vmem %s0, %s254
      %p256 = scmp.lt.s32.totalorder %s17, 1
      %s257 = scalar_select %p256, %s17, 1
      %s258 = smul.addr %s257, 8
      %s259 = scalar_lea.vmem %s1, %s258
      %p260 = scmp.lt.s32.totalorder %s17, 1
      %s261 = scalar_select %p260, %s17, 1
      %s262 = smul.addr %s261, 8
      %s263 = scalar_lea.vmem %s6, %s262
      %v265 = vld [vmem:[%s259] sm:$0xff]
      %v266 = vld [vmem:[%s255] sm:$0xff]
      %v267 = vadd.f32 %v265, %v266
      %v268 = vlaneseq
      %v269 = vshrl.u32 %v268, 7
      %vm270 = vcmp.lt.s32.totalorder %v269, 0
      %v271 = vsub.s32 0, %v269
      %v272 = vsel %vm270, %v271, %v269
      %v273 = vshrl.u32 %v272, 3
      %v274 = vand.u32 %v272, 7
      %v275 = vsub.s32 0, %v274
      %v276 = vsel %vm270, %v275, %v274
      %vm277 = vcmp.ne.s32.totalorder %v276, 0
      %vm278 = vcmp.lt.s32.totalorder %v276, 0
      %vm279 = vmand %vm278, %vm277
      %v280 = vadd.s32 %v276, 8
      %v281 = vsel %vm279, %v280, %v276
      %v282 = vrot.slane %v267, 7
      %vm283 = vcmp.ge.s32.totalorder %v281, 1
      %v284 = vsel %vm283, 1, 0
      %vm285 = vcmp.eq.s32.totalorder %v284, 1
      %v286 = vsel %vm285, %v282, 0.0
      %v287 = vpack.c.bf16 %v286, %v286
      %v288 = vld [vmem:[%s2] sm:$0x3]
      %v289 = vpack.c.bf16 %v267, %v267
      %s290 = scalar_lea.vmem %s2, 2
      %v291 = vld [vmem:[%s290] sm:$0x3]
      %vm292 = vcmask 31744
      %v294 = vsel %vm292, %v289, 0
      %vm296 = vcmask 1041408
      %v298 = vsel %vm296, %v291, 0
      %300 = vmatpush.bf16.msra.mxu0 0
      %301 = vmatpush.bf16.msra.mxu0 0
      %302 = vmatpush.bf16.msra.mxu0 0
      %303 = vmatpush.bf16.msra.mxu0 0
      %304 = vmatpush.bf16.msra.mxu0 0
      %305 = vmatpush.bf16.msra.mxu0 0
      %306 = vmatpush.bf16.msra.mxu0 0
      %307 = vmatpush.bf16.msra.mxu0 %v298
      %308 = vmatmul.bf16.gmra.mxu0 %v294
      %v309 = vpop.f32.mrf.mxu0
      %v310 = vadd.f32 0.0, %v309
      %v311 = vpop.f32.mrf.mxu0
      %312 = vdwg.mxu0
      %v314 = vsel %vm292, %v287, 0
      %v317 = vsel %vm296, %v288, 0
      %319 = vmatpush.bf16.msra.mxu0 0
      %320 = vmatpush.bf16.msra.mxu0 0
      %321 = vmatpush.bf16.msra.mxu0 0
      %322 = vmatpush.bf16.msra.mxu0 0
      %323 = vmatpush.bf16.msra.mxu0 0
      %324 = vmatpush.bf16.msra.mxu0 0
      %325 = vmatpush.bf16.msra.mxu0 0
      %326 = vmatpush.bf16.msra.mxu0 %v317
      %327 = vmatmul.bf16.gmra.mxu0 %v314
      %v328 = vpop.f32.mrf.mxu0
      %v329 = vadd.f32 %v310, %v328
      %v330 = vpop.f32.mrf.mxu0
      %331 = vdwg.mxu0
      %v332 = vrot.slane %v267, 1
      %vm333 = vcmp.lt.s32.totalorder %v281, 7
      %v334 = vsel %vm333, 1, 0
      %vm335 = vcmp.eq.s32.totalorder %v334, 1
      %v336 = vsel %vm335, %v332, 0.0
      %v337 = vpack.c.bf16 %v336, %v336
      %s338 = scalar_lea.vmem %s2, 4
      %v339 = vld [vmem:[%s338] sm:$0x3]
      %v341 = vsel %vm292, %v337, 0
      %v344 = vsel %vm296, %v339, 0
      %346 = vmatpush.bf16.msra.mxu0 0
      %347 = vmatpush.bf16.msra.mxu0 0
      %348 = vmatpush.bf16.msra.mxu0 0
      %349 = vmatpush.bf16.msra.mxu0 0
      %350 = vmatpush.bf16.msra.mxu0 0
      %351 = vmatpush.bf16.msra.mxu0 0
      %352 = vmatpush.bf16.msra.mxu0 0
      %353 = vmatpush.bf16.msra.mxu0 %v344
      %354 = vmatmul.bf16.gmra.mxu0 %v341
      %v355 = vpop.f32.mrf.mxu0
      %v356 = vadd.f32 0.0, %v355
      %v357 = vpop.f32.mrf.mxu0
      %358 = vdwg.mxu0
      %v359 = vadd.f32 %v329, %v356
      %v360 = vld [vmem:[%s3] sm:$0x1]
      %v362 = vperm.slane %v360, 0
      %v364 = vadd.f32 %v359, %v362
      %v365 = vmax.f32 %v364, 0.0
      %v366 = vpack.c.bf16 %v365, %v365
      %v367 = vld [vmem:[%s4] sm:$0xf]
      %v368 = vld [vmem:[%s4 + $0x4] sm:$0xf]
      %v369 = vld [vmem:[%s4 + $0x8] sm:$0xf]
      %v370 = vld [vmem:[%s4 + $0xc] sm:$0xf]
      %v371 = vld [vmem:[%s5] sm:$0x1]
      %v373 = vperm.slane %v371, 0
      %v379 = vunpack.c.l.b16 %v367
      %v380 = vunpack.c.l.b16 %v368
      %v381 = vunpack.c.l.b16 %v369
      %v382 = vunpack.c.l.b16 %v370
      %v383 = vpack.c.b16 %v380, %v379
      %v384 = vpack.c.b16 %v382, %v381
      %vm387 = vcmask 261120
      %v389 = vsel %vm387, %v366, 0
      %391 = vmatpush.bf16.msra.mxu0 0
      %392 = vmatpush.bf16.msra.mxu0 0
      %393 = vmatpush.bf16.msra.mxu0 0
      %394 = vmatpush.bf16.msra.mxu0 0
      %395 = vmatpush.bf16.msra.mxu0 0
      %396 = vmatpush.bf16.msra.mxu0 0
      %397 = vmatpush.bf16.msra.mxu0 %v384
      %398 = vmatpush.bf16.msra.mxu0 %v383
      %399 = vmatmul.bf16.gmra.mxu0 %v389
      %v400 = vpop.f32.mrf.mxu0
      %v401 = vadd.f32 %v373, %v400
      %v402 = vpop.f32.mrf.mxu0
      %403 = vdwg.mxu0
      %v404 = vadd.f32 %v265, %v401
      %405 = vst.msk [vmem:[%s263] sm:$0xff] %vm292, %v404
      %p406 = scmp.lt.s32.totalorder %s17, 1
      %s407 = scalar_select %p406, %s17, 1
      %s408 = smul.addr %s407, 8
      %s409 = scalar_lea.vmem %s6, %s408
      // Predicated region
      $region45: #{_lambda_.1} parent=43 // pred_check
        %p410 = pneg %p171
      $region46: #{_lambda_.1} parent=43 // pred_check_branch
        %412 = sbr.rel (%p410) target = $region48
      $region47: #{_lambda_.1} parent=43 // pred_region
        _
      $region48: #{_lambda_.1} parent=43 // pred_fallthru
        _
    $region44: #{_lambda_.1} parent=5 // pred_fallthru
      _
    %p413 = scmp.le.s32.totalorder 2, %s12
    // Predicated region
    $region49: #{_lambda_.1} parent=5 // pred_check
      %p414 = pneg %p413
    $region50: #{_lambda_.1} parent=5 // pred_check_branch
      %416 = sbr.rel (%p414) target = $region52
    $region51: #{_lambda_.1} parent=5 // pred_region
      %s417 = ssub.s32 %s12, 2
      // Predicated region
      $region53: #{_lambda_.1} parent=51 // pred_check
        %p418 = pneg %p177
      $region54: #{_lambda_.1} parent=51 // pred_check_branch
        %420 = sbr.rel (%p418) target = $region56
      $region55: #{_lambda_.1} parent=51 // pred_region
        %p421 = scmp.lt.s32.totalorder %s18, 1
        %s422 = scalar_select %p421, %s18, 1
        %s423 = smul.addr %s422, 8
        %s424 = scalar_lea.vmem %s6, %s423
      $region56: #{_lambda_.1} parent=51 // pred_fallthru
        _
    $region52: #{_lambda_.1} parent=5 // pred_fallthru
      _
  $region6: #{_lambda_.1} parent=0 // loop_footer
    %s16 = sadd.s32 1, %s12
  $region7: #{_lambda_.1} parent=0 // loop_footer_branch
    %11 = sbr.rel target = $region3
  $region8: #{_lambda_.1} parent=0 // loop_exit
    _

</llo_original>
